<compile_context>
chip_gen: v5e
topology: v5e:2x2
jax: 0.10.0
libtpu: 0.0.40
codegen_flags: <defaults>
</compile_context>

<pallas_src>
import functools
import sys

import jax
import jax.numpy as jnp
from jax import lax
from jax.experimental import pallas as pl
from jax.experimental.pallas import tpu as pltpu

SAMPLE_RATE = 16000
TOLERABLE_SEQLEN_DIFF = 10

_LAYERNORM_EPS = 1e-5


def _vmem_plan():
    """Generation-aware VMEM budgeting.

    Returns (block_bytes_budget, vmem_limit_bytes, max_t_tile, min_grid_steps).
    """
    vmem_cap = None
    try:
        info = pltpu.get_tpu_info()
        vmem_cap = getattr(info, "vmem_capacity_bytes", None)
    except Exception:
        vmem_cap = None
    if vmem_cap is None:
        vmem_cap = 64 << 20            # conservative: assume v7x-sized per-TC VMEM
    if vmem_cap >= (100 << 20):
        # v5e / v6e: 128 MiB VMEM, single TensorCore -> only need pipeline fill.
        return 72 << 20, 96 << 20, 2048, 4
    # v7x: 64 MiB per TensorCore -> leave >=16 MiB headroom for compiler
    # temporaries (esp. normalize=True intermediates) and ask for >=8 grid
    # steps so both TCs get work and the DMA pipeline fills.
    return 36 << 20, 48 << 20, 1024, 8


# ----------------------------- Pallas kernel ------------------------------- #
def _weighted_sum_kernel(w_ref, *refs, num_layers, normalize, inv_d):
    # w_ref      : SMEM, shape (L,)       -- softmax-normalized layer weights
    # refs[:L]   : VMEM, (t_tile, D) each -- one (batch, time-tile) slab per layer
    # refs[L]    : VMEM, (t_tile, D)      -- output slab
    feat_refs = refs[:num_layers]
    out_ref = refs[num_layers]

    def load(l):
        x = feat_refs[l][...].astype(jnp.float32)      # load ONE layer at a time
        if normalize:
            # Fused one-pass F.layer_norm over D (no affine), eps = 1e-5.
            s = jnp.sum(x, axis=-1, keepdims=True)
            ss = jnp.sum(x * x, axis=-1, keepdims=True)
            mean = s * inv_d
            # Clamp: E[x^2]-mean^2 can go slightly negative from cancellation.
            var = jnp.maximum(ss * inv_d - mean * mean, 0.0)
            x = (x - mean) * lax.rsqrt(var + _LAYERNORM_EPS)
        return x

    # Initialize the accumulator from layer 0 (saves a block-sized zeros store
    # and a redundant VALU add per step).
    acc = w_ref[0] * load(0)
    for l in range(1, num_layers):                     # static unroll over layers
        acc = acc + w_ref[l] * load(l)
    out_ref[...] = acc.astype(out_ref.dtype)


def weighted_sum_pallas(feature_list, weights, *, normalize=False, t_tile=None):
    """feature_list: L tensors of shape [B, T, D]; weights: [L] raw logits -> [B, T, D]."""
    L = len(feature_list)
    B, T, D = feature_list[0].shape
    dtype = feature_list[0].dtype
    itemsize = jnp.dtype(dtype).itemsize

    block_budget, vmem_limit, max_t_tile, min_steps = _vmem_plan()

    # Sublane quantum for the second-to-last (time) dim.
    sub = 8 if itemsize >= 4 else (16 if itemsize == 2 else 32)

    if t_tile is None:
        bytes_per_row = D * (L + 1) * itemsize             # L inputs + 1 output per row
        rows = block_budget // (2 * bytes_per_row)         # 2x: double buffering
        rows = max(sub, (rows // sub) * sub)
        t_tile = int(min(rows, max_t_tile, -(-T // sub) * sub))
    t_tile = max(sub, (t_tile // sub) * sub)

    # Keep enough grid steps for megacore sharding (v7x) / pipeline fill.
    while t_tile > sub and B * pl.cdiv(T, t_tile) < min_steps:
        t_tile = max(sub, ((t_tile // 2) // sub) * sub)

    grid = (B, pl.cdiv(T, t_tile))

    # softmax over L scalars: tiny, stays in plain JAX glue.
    norm_w = jax.nn.softmax(weights.astype(jnp.float32), axis=-1)

    kernel = functools.partial(
        _weighted_sum_kernel, num_layers=L, normalize=normalize, inv_d=1.0 / D
    )

    # Full-D blocks keep D on the 128-lane axis; if an upstream ever produces a
    # D that is not a multiple of 128, pad it once at the model boundary rather
    # than letting the kernel emit masked partial stores.
    feat_spec = pl.BlockSpec((pl.Squeezed(), t_tile, D), lambda b, t: (b, t, 0))
    out_spec = pl.BlockSpec((pl.Squeezed(), t_tile, D), lambda b, t: (b, t, 0))

    bytes_accessed = int((L + 1) * B * T * D * itemsize + L * 4)
    flops = int((7 if normalize else 2) * L * B * T * D)
    transcendentals = int(L * B * T) if normalize else 0

    return pl.pallas_call(
        kernel,
        out_shape=jax.ShapeDtypeStruct((B, T, D), dtype),
        grid=grid,
        in_specs=[pl.BlockSpec(memory_space=pltpu.SMEM)] + [feat_spec] * L,
        out_specs=out_spec,
        compiler_params=pltpu.CompilerParams(
            dimension_semantics=("parallel", "parallel"),
            vmem_limit_bytes=vmem_limit,
        ),
        cost_estimate=pl.CostEstimate(
            flops=flops,
            transcendentals=transcendentals,
            bytes_accessed=bytes_accessed,
        ),
    )(norm_w, *feature_list)


# --------------------------- Featurizer wrapper ----------------------------- #
class Featurizer:
    """JAX/Pallas re-implementation of the s3prl Featurizer forward pass."""

    def __init__(self, layer_num, feature_dim, feature_seqlen, max_wav_len,
                 normalize=False):
        self.name = "Featurizer"
        self.layer_num = layer_num
        self.normalize = normalize
        self.output_dim = feature_dim
        # nn.Parameter(torch.zeros(layer_num)) -> deterministic zeros
        self.weights = jnp.zeros((layer_num,), jnp.float32)
        # dynamic downsample rate, as in the torch module fallback branch
        self.downsample_rate = round(max_wav_len / feature_seqlen)

    def _select_feature(self, features):
        feature = features.get("hidden_states")
        if isinstance(feature, (list, tuple)) and len(feature) == 1:
            feature = feature[0]
        return feature

    def _weighted_sum(self, feature_list):
        assert self.layer_num == len(feature_list)
        # No jnp.stack: layers go straight into the kernel as separate inputs.
        return weighted_sum_pallas(
            list(feature_list), self.weights, normalize=self.normalize
        )

    def tolist(self, paired_wavs, paired_feature):
        assert paired_feature.ndim == 3, "(batch_size, max_seq_len, feat_dim)"
        feature_len = [round(len(w) / self.downsample_rate) for w in paired_wavs]
        length_diff = abs(
            paired_feature.shape[1]
            - round(max(len(w) for w in paired_wavs) / self.downsample_rate)
        )
        assert length_diff < TOLERABLE_SEQLEN_DIFF, f"{length_diff} >= {TOLERABLE_SEQLEN_DIFF}"
        return [f[:l] for f, l in zip(paired_feature, feature_len)]

    def forward(self, paired_wavs, paired_features):
        feature = self._select_feature(paired_features)
        if isinstance(feature, (list, tuple)):
            feature = self._weighted_sum(feature)
        return self.tolist(paired_wavs, feature)


# ------------------------------ reference ----------------------------------- #
def _weighted_sum_ref(feature_list, weights, normalize=False):
    x = jnp.stack(feature_list, axis=0).astype(jnp.float32)
    if normalize:
        mean = jnp.mean(x, axis=-1, keepdims=True)
        var = jnp.mean((x - mean) ** 2, axis=-1, keepdims=True)
        x = (x - mean) * lax.rsqrt(var + _LAYERNORM_EPS)
    w = jax.nn.softmax(weights.astype(jnp.float32))
    return jnp.einsum("l,lbtd->btd", w, x).astype(feature_list[0].dtype)


# --------------------------------- main -------------------------------------- #
if __name__ == "__main__":
    key = jax.random.PRNGKey(0)

    # Small, TPU-layout-friendly shapes.  T=13 is deliberately NOT a multiple of
    # the time tile to exercise the ragged-last-tile path (no pad / no slice).
    L, B, T, D = 5, 2, 13, 128
    downsample = 320
    wav_lens = [T * downsample, (T - 2) * downsample]      # [4160, 3520]

    k_wav, k_feat, k_w = jax.random.split(key, 3)
    paired_wavs = [
        jax.random.normal(jax.random.fold_in(k_wav, i), (n,), jnp.float32)
        for i, n in enumerate(wav_lens)
    ]
    hidden_states = [
        jax.random.normal(jax.random.fold_in(k_feat, l), (B, T, D), jnp.float32)
        for l in range(L)
    ]
    paired_features = {"hidden_states": hidden_states}

    featurizer = Featurizer(
        layer_num=L,
        feature_dim=D,
        feature_seqlen=T,
        max_wav_len=max(wav_lens),
        normalize=False,
    )
    # Use non-trivial (random) layer weights so the softmax mixing is exercised.
    featurizer.weights = jax.random.normal(k_w, (L,), jnp.float32)

    out_list = featurizer.forward(paired_wavs, paired_features)
    out_list = [jax.block_until_ready(o) for o in out_list]

    ok = True

    # 1) full forward path (weighted sum + per-utterance slicing), normalize=False
    ref_full = _weighted_sum_ref(hidden_states, featurizer.weights, normalize=False)
    ref_lens = [round(n / featurizer.downsample_rate) for n in wav_lens]
    for o, r, l in zip(out_list, ref_full, ref_lens):
        ok &= o.shape == (l, D)
        ok &= bool(jnp.allclose(o, r[:l], atol=1e-5, rtol=1e-5))

    # 2) normalize=True path (fused one-pass layer norm inside the kernel)
    out_norm = weighted_sum_pallas(hidden_states, featurizer.weights, normalize=True)
    out_norm = jax.block_until_ready(out_norm)
    ref_norm = _weighted_sum_ref(hidden_states, featurizer.weights, normalize=True)
    ok &= bool(jnp.allclose(out_norm, ref_norm, atol=1e-4, rtol=1e-4))

    if not ok:
        print("MISMATCH", file=sys.stderr)
        sys.exit(1)
    print("KERNEL_OK")
</pallas_src>

<mosaic_0001>
module attributes {stable_mosaic.version = 11 : i64} {
  func.func @_weighted_sum_kernel(%arg0: i32, %arg1: i32, %arg2: memref<5xf32, #tpu.memory_space<smem>>, %arg3: memref<1x8x128xf32, #tpu.memory_space<vmem>>, %arg4: memref<1x8x128xf32, #tpu.memory_space<vmem>>, %arg5: memref<1x8x128xf32, #tpu.memory_space<vmem>>, %arg6: memref<1x8x128xf32, #tpu.memory_space<vmem>>, %arg7: memref<1x8x128xf32, #tpu.memory_space<vmem>>, %arg8: memref<1x8x128xf32, #tpu.memory_space<vmem>>) attributes {dimension_semantics = [#tpu.dimension_semantics<parallel>, #tpu.dimension_semantics<parallel>], iteration_bounds = array<i64: 2, 2>, scalar_prefetch = 0 : i64, scratch_operands = 0 : i64, tpu.core_type = #tpu.core_type<tc>, window_params = [{transform_indices = @transform_0, window_bounds = array<i64: 5>}, {transform_indices = @transform_1, window_bounds = array<i64: 1, 8, 128>}, {transform_indices = @transform_2, window_bounds = array<i64: 1, 8, 128>}, {transform_indices = @transform_3, window_bounds = array<i64: 1, 8, 128>}, {transform_indices = @transform_4, window_bounds = array<i64: 1, 8, 128>}, {transform_indices = @transform_5, window_bounds = array<i64: 1, 8, 128>}, {transform_indices = @transform_6, window_bounds = array<i64: 1, 8, 128>}]} {
    %c0 = arith.constant 0 : index
    %0 = memref.load %arg2[%c0] : memref<5xf32, #tpu.memory_space<smem>>
    %c0_0 = arith.constant 0 : index
    %c0_1 = arith.constant 0 : index
    %c0_2 = arith.constant 0 : index
    %1 = vector.load %arg3[%c0_0, %c0_1, %c0_2] : memref<1x8x128xf32, #tpu.memory_space<vmem>>, vector<1x8x128xf32>
    %2 = vector.shape_cast %1 : vector<1x8x128xf32> to vector<8x128xf32>
    %3 = vector.broadcast %0 : f32 to vector<8x128xf32>
    %4 = arith.mulf %3, %2 : vector<8x128xf32>
    %c1 = arith.constant 1 : index
    %5 = memref.load %arg2[%c1] : memref<5xf32, #tpu.memory_space<smem>>
    %c0_3 = arith.constant 0 : index
    %c0_4 = arith.constant 0 : index
    %c0_5 = arith.constant 0 : index
    %6 = vector.load %arg4[%c0_3, %c0_4, %c0_5] : memref<1x8x128xf32, #tpu.memory_space<vmem>>, vector<1x8x128xf32>
    %7 = vector.shape_cast %6 : vector<1x8x128xf32> to vector<8x128xf32>
    %8 = vector.broadcast %5 : f32 to vector<8x128xf32>
    %9 = arith.mulf %8, %7 : vector<8x128xf32>
    %10 = arith.addf %4, %9 : vector<8x128xf32>
    %c2 = arith.constant 2 : index
    %11 = memref.load %arg2[%c2] : memref<5xf32, #tpu.memory_space<smem>>
    %c0_6 = arith.constant 0 : index
    %c0_7 = arith.constant 0 : index
    %c0_8 = arith.constant 0 : index
    %12 = vector.load %arg5[%c0_6, %c0_7, %c0_8] : memref<1x8x128xf32, #tpu.memory_space<vmem>>, vector<1x8x128xf32>
    %13 = vector.shape_cast %12 : vector<1x8x128xf32> to vector<8x128xf32>
    %14 = vector.broadcast %11 : f32 to vector<8x128xf32>
    %15 = arith.mulf %14, %13 : vector<8x128xf32>
    %16 = arith.addf %10, %15 : vector<8x128xf32>
    %c3 = arith.constant 3 : index
    %17 = memref.load %arg2[%c3] : memref<5xf32, #tpu.memory_space<smem>>
    %c0_9 = arith.constant 0 : index
    %c0_10 = arith.constant 0 : index
    %c0_11 = arith.constant 0 : index
    %18 = vector.load %arg6[%c0_9, %c0_10, %c0_11] : memref<1x8x128xf32, #tpu.memory_space<vmem>>, vector<1x8x128xf32>
    %19 = vector.shape_cast %18 : vector<1x8x128xf32> to vector<8x128xf32>
    %20 = vector.broadcast %17 : f32 to vector<8x128xf32>
    %21 = arith.mulf %20, %19 : vector<8x128xf32>
    %22 = arith.addf %16, %21 : vector<8x128xf32>
    %c4 = arith.constant 4 : index
    %23 = memref.load %arg2[%c4] : memref<5xf32, #tpu.memory_space<smem>>
    %c0_12 = arith.constant 0 : index
    %c0_13 = arith.constant 0 : index
    %c0_14 = arith.constant 0 : index
    %24 = vector.load %arg7[%c0_12, %c0_13, %c0_14] : memref<1x8x128xf32, #tpu.memory_space<vmem>>, vector<1x8x128xf32>
    %25 = vector.shape_cast %24 : vector<1x8x128xf32> to vector<8x128xf32>
    %26 = vector.broadcast %23 : f32 to vector<8x128xf32>
    %27 = arith.mulf %26, %25 : vector<8x128xf32>
    %28 = arith.addf %22, %27 : vector<8x128xf32>
    %c0_15 = arith.constant 0 : index
    %c0_16 = arith.constant 0 : index
    %c0_17 = arith.constant 0 : index
    %29 = vector.load %arg8[%c0_15, %c0_16, %c0_17] : memref<1x8x128xf32, #tpu.memory_space<vmem>>, vector<1x8x128xf32>
    %30 = vector.shape_cast %29 : vector<1x8x128xf32> to vector<8x128xf32>
    %31 = vector.shape_cast %28 : vector<8x128xf32> to vector<1x8x128xf32>
    tpu.vector_store %arg8[%c0_15, %c0_16, %c0_17], %31 {strides = array<i32>} : memref<1x8x128xf32, #tpu.memory_space<vmem>>, vector<1x8x128xf32>,
    return
  }
  func.func @transform_0(%arg0: i32, %arg1: i32) -> i32 {
    %c0_i32 = arith.constant 0 : i32
    %c0_i32_0 = arith.constant 0 : i32
    return %c0_i32 : i32
  }
  func.func @transform_1(%arg0: i32, %arg1: i32) -> (i32, i32, i32) {
    %c0_i32 = arith.constant 0 : i32
    %c0_i32_0 = arith.constant 0 : i32
    return %arg0, %arg1, %c0_i32 : i32, i32, i32
  }
  func.func @transform_2(%arg0: i32, %arg1: i32) -> (i32, i32, i32) {
    %c0_i32 = arith.constant 0 : i32
    %c0_i32_0 = arith.constant 0 : i32
    return %arg0, %arg1, %c0_i32 : i32, i32, i32
  }
  func.func @transform_3(%arg0: i32, %arg1: i32) -> (i32, i32, i32) {
    %c0_i32 = arith.constant 0 : i32
    %c0_i32_0 = arith.constant 0 : i32
    return %arg0, %arg1, %c0_i32 : i32, i32, i32
  }
  func.func @transform_4(%arg0: i32, %arg1: i32) -> (i32, i32, i32) {
    %c0_i32 = arith.constant 0 : i32
    %c0_i32_0 = arith.constant 0 : i32
    return %arg0, %arg1, %c0_i32 : i32, i32, i32
  }
  func.func @transform_5(%arg0: i32, %arg1: i32) -> (i32, i32, i32) {
    %c0_i32 = arith.constant 0 : i32
    %c0_i32_0 = arith.constant 0 : i32
    return %arg0, %arg1, %c0_i32 : i32, i32, i32
  }
  func.func @transform_6(%arg0: i32, %arg1: i32) -> (i32, i32, i32) {
    %c0_i32 = arith.constant 0 : i32
    %c0_i32_0 = arith.constant 0 : i32
    return %arg0, %arg1, %c0_i32 : i32, i32, i32
  }
}

</mosaic_0001>

<llo_original>
// kernel: tpu_custom_call.1
$region0: #{tpu_custom_call.1}
  #allocation0 [shape = 'u32[]', space=smem, size = 0x4, offset = 0x4, fixed_abs, tag = 'smem constant byte address 0x4 - core index']
  #allocation1 [shape = 'u32[72,128]{1,0:T(1,128)}', space=vmem, size = 0x9000, scoped, tag = 'internal scratch']
  %s0 = inlined_call_operand.vmem [shape: f32[5], index: 0, kind: input, shape index: {}]
  %s1 = inlined_call_operand.vmem [shape: f32[2,13,128], index: 1, kind: input, shape index: {}]
  %s2 = inlined_call_operand.vmem [shape: f32[2,13,128], index: 2, kind: input, shape index: {}]
  %s3 = inlined_call_operand.vmem [shape: f32[2,13,128], index: 3, kind: input, shape index: {}]
  %s4 = inlined_call_operand.vmem [shape: f32[2,13,128], index: 4, kind: input, shape index: {}]
  %s5 = inlined_call_operand.vmem [shape: f32[2,13,128], index: 5, kind: input, shape index: {}]
  %s6 = inlined_call_operand.vmem [shape: f32[2,13,128], index: 6, kind: output, shape index: {}]
  %s7 = sld [smem:[#allocation0]]
  $region61: #{tpu_custom_call.1} parent=0
    _
  %s9 = ssub.s32 1, %s7
  %s10 = scalar_select 0, %s9, %s7
  $region1: #{tpu_custom_call.1} parent=0
    #allocation2 [shape = 'u8[512]{0}', space=smem, size = 0x200, scoped, tag = 'input window, operand 0, single buffered']
    #allocation3 [shape = 's32[2]{0}', space=sflag, size = 0x8, scoped, tag = 'scoped memory for tpu_custom_call.1']
    %11 = vsyncpa [#allocation3], 0
    loop: start=0, step=1, limit=6
    $region2: #{tpu_custom_call.1} parent=1 // loop_pre_header
      _
    $region3: #{tpu_custom_call.1} parent=1 // loop_header
      %s13 = sphi 0, %s17
      %p14 = scmp.ge.s32.totalorder %s13, 6
      %s20 = sphi 0, %s32
      %s21 = sphi 0, %s28
      %s22 = sphi 0, %s20
      %s23 = sphi 0, %s21
      %s24 = sphi 0, %s22
      %s25 = sphi 0, %s23
      %s33 = sphi 0, %s33
      %s35 = sphi 0, %s33
      %s36 = sphi 0, %s35
      %s50 = sphi 0, %s36
      %s58 = sphi 0, %s60
      %s61 = sphi 0, %s58
      %s62 = sphi 0, %s61
      %s78 = sphi 0, %s62
      %s86 = sphi 0, %s88
      %s89 = sphi 0, %s86
      %s90 = sphi 0, %s89
      %s106 = sphi 0, %s90
      %s114 = sphi 0, %s116
      %s117 = sphi 0, %s114
      %s118 = sphi 0, %s117
      %s134 = sphi 0, %s118
      %s142 = sphi 0, %s144
      %s145 = sphi 0, %s142
      %s146 = sphi 0, %s145
      %s162 = sphi 0, %s146
      %s170 = sphi 0, %s172
      %s173 = sphi 0, %s170
      %s174 = sphi 0, %s173
      %s190 = sphi 0, %s174
      %s198 = sphi 0, %s200
      %s201 = sphi 0, %s198
      %s202 = sphi 0, %s201
      %s218 = sphi 0, %s202
    $region4: #{tpu_custom_call.1} parent=1 // loop_header_branch
      %16 = sbr.rel (%p14) target = $region8
    $region5: #{tpu_custom_call.1} parent=1 // loop_body
      %s18 = ssub.s32 %s13, 1
      %s19 = ssub.s32 %s13, 2
      %s26 = sadd.s32 1, %s21
      %p27 = scmp.ge.s32.totalorder %s26, 2
      %s28 = scalar_select %p27, 0, %s26
      %s29 = sadd.s32 1, %s20
      %s30 = scalar_select %p27, %s29, %s20
      %p31 = scmp.ge.s32.totalorder %s30, 2
      %s32 = scalar_select %p31, 0, %s30
      %s34 = sadd.s32 %s33, 1
      %p37 = scmp.eq.s32.totalorder %s13, 3
      %p38 = scmp.ne.s32.totalorder %s33, %s35
      %p39 = scmp.eq.s32.totalorder %s13, 0
      %p40 = por %p38, %p39
      %p41 = scmp.ne.s32.totalorder %s33, %s35
      %p42 = scmp.eq.s32.totalorder %s18, 3
      %p43 = por %p41, %p42
      %p44 = scmp.ne.s32.totalorder %s35, %s36
      %p45 = scmp.eq.s32.totalorder %s18, 0
      %p46 = por %p44, %p45
      %p47 = scmp.ne.s32.totalorder %s35, %s36
      %p48 = scmp.eq.s32.totalorder %s19, 3
      %p49 = por %p47, %p48
      %p51 = scmp.ne.s32.totalorder %s36, %s50
      %p52 = scmp.eq.s32.totalorder %s19, 0
      %p53 = por %p51, %p52
      %s54 = ssub.s32 %s20, %s32
      %s55 = ssub.s32 %s21, %s28
      %s56 = sor.u32 %s54, %s55
      %p57 = scmp.eq.s32.totalorder %s56, 0
      %s59 = sadd.s32 %s58, 1
      %s60 = scalar_select %p57, %s58, %s59
      %p63 = pneg %p57
      %p64 = scmp.eq.s32.totalorder %s13, 3
      %p65 = por %p63, %p64
      %p66 = scmp.ne.s32.totalorder %s58, %s61
      %p67 = scmp.eq.s32.totalorder %s13, 0
      %p68 = por %p66, %p67
      %p69 = scmp.ne.s32.totalorder %s58, %s61
      %p70 = scmp.eq.s32.totalorder %s18, 3
      %p71 = por %p69, %p70
      %p72 = scmp.ne.s32.totalorder %s61, %s62
      %p73 = scmp.eq.s32.totalorder %s18, 0
      %p74 = por %p72, %p73
      %p75 = scmp.ne.s32.totalorder %s61, %s62
      %p76 = scmp.eq.s32.totalorder %s19, 3
      %p77 = por %p75, %p76
      %p79 = scmp.ne.s32.totalorder %s62, %s78
      %p80 = scmp.eq.s32.totalorder %s19, 0
      %p81 = por %p79, %p80
      %s82 = ssub.s32 %s20, %s32
      %s83 = ssub.s32 %s21, %s28
      %s84 = sor.u32 %s82, %s83
      %p85 = scmp.eq.s32.totalorder %s84, 0
      %s87 = sadd.s32 %s86, 1
      %s88 = scalar_select %p85, %s86, %s87
      %p91 = pneg %p85
      %p92 = scmp.eq.s32.totalorder %s13, 3
      %p93 = por %p91, %p92
      %p94 = scmp.ne.s32.totalorder %s86, %s89
      %p95 = scmp.eq.s32.totalorder %s13, 0
      %p96 = por %p94, %p95
      %p97 = scmp.ne.s32.totalorder %s86, %s89
      %p98 = scmp.eq.s32.totalorder %s18, 3
      %p99 = por %p97, %p98
      %p100 = scmp.ne.s32.totalorder %s89, %s90
      %p101 = scmp.eq.s32.totalorder %s18, 0
      %p102 = por %p100, %p101
      %p103 = scmp.ne.s32.totalorder %s89, %s90
      %p104 = scmp.eq.s32.totalorder %s19, 3
      %p105 = por %p103, %p104
      %p107 = scmp.ne.s32.totalorder %s90, %s106
      %p108 = scmp.eq.s32.totalorder %s19, 0
      %p109 = por %p107, %p108
      %s110 = ssub.s32 %s20, %s32
      %s111 = ssub.s32 %s21, %s28
      %s112 = sor.u32 %s110, %s111
      %p113 = scmp.eq.s32.totalorder %s112, 0
      %s115 = sadd.s32 %s114, 1
      %s116 = scalar_select %p113, %s114, %s115
      %p119 = pneg %p113
      %p120 = scmp.eq.s32.totalorder %s13, 3
      %p121 = por %p119, %p120
      %p122 = scmp.ne.s32.totalorder %s114, %s117
      %p123 = scmp.eq.s32.totalorder %s13, 0
      %p124 = por %p122, %p123
      %p125 = scmp.ne.s32.totalorder %s114, %s117
      %p126 = scmp.eq.s32.totalorder %s18, 3
      %p127 = por %p125, %p126
      %p128 = scmp.ne.s32.totalorder %s117, %s118
      %p129 = scmp.eq.s32.totalorder %s18, 0
      %p130 = por %p128, %p129
      %p131 = scmp.ne.s32.totalorder %s117, %s118
      %p132 = scmp.eq.s32.totalorder %s19, 3
      %p133 = por %p131, %p132
      %p135 = scmp.ne.s32.totalorder %s118, %s134
      %p136 = scmp.eq.s32.totalorder %s19, 0
      %p137 = por %p135, %p136
      %s138 = ssub.s32 %s20, %s32
      %s139 = ssub.s32 %s21, %s28
      %s140 = sor.u32 %s138, %s139
      %p141 = scmp.eq.s32.totalorder %s140, 0
      %s143 = sadd.s32 %s142, 1
      %s144 = scalar_select %p141, %s142, %s143
      %p147 = pneg %p141
      %p148 = scmp.eq.s32.totalorder %s13, 3
      %p149 = por %p147, %p148
      %p150 = scmp.ne.s32.totalorder %s142, %s145
      %p151 = scmp.eq.s32.totalorder %s13, 0
      %p152 = por %p150, %p151
      %p153 = scmp.ne.s32.totalorder %s142, %s145
      %p154 = scmp.eq.s32.totalorder %s18, 3
      %p155 = por %p153, %p154
      %p156 = scmp.ne.s32.totalorder %s145, %s146
      %p157 = scmp.eq.s32.totalorder %s18, 0
      %p158 = por %p156, %p157
      %p159 = scmp.ne.s32.totalorder %s145, %s146
      %p160 = scmp.eq.s32.totalorder %s19, 3
      %p161 = por %p159, %p160
      %p163 = scmp.ne.s32.totalorder %s146, %s162
      %p164 = scmp.eq.s32.totalorder %s19, 0
      %p165 = por %p163, %p164
      %s166 = ssub.s32 %s20, %s32
      %s167 = ssub.s32 %s21, %s28
      %s168 = sor.u32 %s166, %s167
      %p169 = scmp.eq.s32.totalorder %s168, 0
      %s171 = sadd.s32 %s170, 1
      %s172 = scalar_select %p169, %s170, %s171
      %p175 = pneg %p169
      %p176 = scmp.eq.s32.totalorder %s13, 3
      %p177 = por %p175, %p176
      %p178 = scmp.ne.s32.totalorder %s170, %s173
      %p179 = scmp.eq.s32.totalorder %s13, 0
      %p180 = por %p178, %p179
      %p181 = scmp.ne.s32.totalorder %s170, %s173
      %p182 = scmp.eq.s32.totalorder %s18, 3
      %p183 = por %p181, %p182
      %p184 = scmp.ne.s32.totalorder %s173, %s174
      %p185 = scmp.eq.s32.totalorder %s18, 0
      %p186 = por %p184, %p185
      %p187 = scmp.ne.s32.totalorder %s173, %s174
      %p188 = scmp.eq.s32.totalorder %s19, 3
      %p189 = por %p187, %p188
      %p191 = scmp.ne.s32.totalorder %s174, %s190
      %p192 = scmp.eq.s32.totalorder %s19, 0
      %p193 = por %p191, %p192
      %s194 = ssub.s32 %s20, %s32
      %s195 = ssub.s32 %s21, %s28
      %s196 = sor.u32 %s194, %s195
      %p197 = scmp.eq.s32.totalorder %s196, 0
      %s199 = sadd.s32 %s198, 1
      %s200 = scalar_select %p197, %s198, %s199
      %p203 = pneg %p197
      %p204 = scmp.eq.s32.totalorder %s13, 3
      %p205 = por %p203, %p204
      %p206 = scmp.ne.s32.totalorder %s198, %s201
      %p207 = scmp.eq.s32.totalorder %s13, 0
      %p208 = por %p206, %p207
      %p209 = scmp.ne.s32.totalorder %s198, %s201
      %p210 = scmp.eq.s32.totalorder %s18, 3
      %p211 = por %p209, %p210
      %p212 = scmp.ne.s32.totalorder %s201, %s202
      %p213 = scmp.eq.s32.totalorder %s18, 0
      %p214 = por %p212, %p213
      %p215 = scmp.ne.s32.totalorder %s201, %s202
      %p216 = scmp.eq.s32.totalorder %s19, 3
      %p217 = por %p215, %p216
      %p219 = scmp.ne.s32.totalorder %s202, %s218
      %p220 = scmp.eq.s32.totalorder %s19, 0
      %p221 = por %p219, %p220
      %p222 = scmp.le.s32.totalorder 1, %s13
      %p223 = scmp.lt.s32.totalorder %s13, 5
      %p224 = pnand %p222, %p223
      %p225 = pneg %p224
      // Predicated region
      $region9: #{tpu_custom_call.1} parent=5 // pred_check
        _
      $region10: #{tpu_custom_call.1} parent=5 // pred_check_branch
        %227 = sbr.rel (%p224) target = $region12
      $region11: #{tpu_custom_call.1} parent=5 // pred_region
        %s228 = ssub.s32 %s13, 1
        // Predicated region
        $region13: #{tpu_custom_call.1} parent=11 // pred_check
          %p229 = pneg %p46
        $region14: #{tpu_custom_call.1} parent=11 // pred_check_branch
          %231 = sbr.rel (%p229) target = $region16
        $region15: #{tpu_custom_call.1} parent=11 // pred_region
          %233 = vsyncadd [#allocation3], 0
          %s235 = sshll.u32 %s0, 4
          %s236 = int_to_ptr.vmem [resolvable:$true] %s235
          %238 = dma.vmem_to_smem %s236, 16, [#allocation2], [#allocation3]
        $region16: #{tpu_custom_call.1} parent=11 // pred_fallthru
          _
      $region12: #{tpu_custom_call.1} parent=5 // pred_fallthru
        _
      %p239 = scmp.lt.s32.totalorder %s13, 4
      // Predicated region
      $region17: #{tpu_custom_call.1} parent=5 // pred_check
        %p240 = pneg %p239
      $region18: #{tpu_custom_call.1} parent=5 // pred_check_branch
        %242 = sbr.rel (%p240) target = $region20
      $region19: #{tpu_custom_call.1} parent=5 // pred_region
        // Predicated region
        $region21: #{tpu_custom_call.1} parent=19 // pred_check
          %p243 = pneg %p68
        $region22: #{tpu_custom_call.1} parent=19 // pred_check_branch
          %245 = sbr.rel (%p243) target = $region24
        $region23: #{tpu_custom_call.1} parent=19 // pred_region
          %p246 = scmp.lt.s32.totalorder %s20, 1
          %s247 = scalar_select %p246, %s20, 1
          %p248 = scmp.lt.s32.totalorder %s21, 1
          %s249 = scalar_select %p248, %s21, 1
          %s250 = smul.addr %s247, 2
          %s251 = sadd.s32 %s249, %s250
          %s252 = smul.addr %s251, 8
          %s253 = scalar_lea.vmem %s1, %s252
        $region24: #{tpu_custom_call.1} parent=19 // pred_fallthru
          _
        // Predicated region
        $region25: #{tpu_custom_call.1} parent=19 // pred_check
          %p254 = pneg %p96
        $region26: #{tpu_custom_call.1} parent=19 // pred_check_branch
          %256 = sbr.rel (%p254) target = $region28
        $region27: #{tpu_custom_call.1} parent=19 // pred_region
          %p257 = scmp.lt.s32.totalorder %s20, 1
          %s258 = scalar_select %p257, %s20, 1
          %p259 = scmp.lt.s32.totalorder %s21, 1
          %s260 = scalar_select %p259, %s21, 1
          %s261 = smul.addr %s258, 2
          %s262 = sadd.s32 %s260, %s261
          %s263 = smul.addr %s262, 8
          %s264 = scalar_lea.vmem %s2, %s263
        $region28: #{tpu_custom_call.1} parent=19 // pred_fallthru
          _
        // Predicated region
        $region29: #{tpu_custom_call.1} parent=19 // pred_check
          %p265 = pneg %p124
        $region30: #{tpu_custom_call.1} parent=19 // pred_check_branch
          %267 = sbr.rel (%p265) target = $region32
        $region31: #{tpu_custom_call.1} parent=19 // pred_region
          %p268 = scmp.lt.s32.totalorder %s20, 1
          %s269 = scalar_select %p268, %s20, 1
          %p270 = scmp.lt.s32.totalorder %s21, 1
          %s271 = scalar_select %p270, %s21, 1
          %s272 = smul.addr %s269, 2
          %s273 = sadd.s32 %s271, %s272
          %s274 = smul.addr %s273, 8
          %s275 = scalar_lea.vmem %s3, %s274
        $region32: #{tpu_custom_call.1} parent=19 // pred_fallthru
          _
        // Predicated region
        $region33: #{tpu_custom_call.1} parent=19 // pred_check
          %p276 = pneg %p152
        $region34: #{tpu_custom_call.1} parent=19 // pred_check_branch
          %278 = sbr.rel (%p276) target = $region36
        $region35: #{tpu_custom_call.1} parent=19 // pred_region
          %p279 = scmp.lt.s32.totalorder %s20, 1
          %s280 = scalar_select %p279, %s20, 1
          %p281 = scmp.lt.s32.totalorder %s21, 1
          %s282 = scalar_select %p281, %s21, 1
          %s283 = smul.addr %s280, 2
          %s284 = sadd.s32 %s282, %s283
          %s285 = smul.addr %s284, 8
          %s286 = scalar_lea.vmem %s4, %s285
        $region36: #{tpu_custom_call.1} parent=19 // pred_fallthru
          _
        // Predicated region
        $region37: #{tpu_custom_call.1} parent=19 // pred_check
          %p287 = pneg %p180
        $region38: #{tpu_custom_call.1} parent=19 // pred_check_branch
          %289 = sbr.rel (%p287) target = $region40
        $region39: #{tpu_custom_call.1} parent=19 // pred_region
          %p290 = scmp.lt.s32.totalorder %s20, 1
          %s291 = scalar_select %p290, %s20, 1
          %p292 = scmp.lt.s32.totalorder %s21, 1
          %s293 = scalar_select %p292, %s21, 1
          %s294 = smul.addr %s291, 2
          %s295 = sadd.s32 %s293, %s294
          %s296 = smul.addr %s295, 8
          %s297 = scalar_lea.vmem %s5, %s296
        $region40: #{tpu_custom_call.1} parent=19 // pred_fallthru
          _
      $region20: #{tpu_custom_call.1} parent=5 // pred_fallthru
        _
      %p298 = scmp.le.s32.totalorder 1, %s13
      %p299 = scmp.lt.s32.totalorder %s13, 5
      %p300 = pnand %p298, %p299
      %p301 = pneg %p300
      // Predicated region
      $region41: #{tpu_custom_call.1} parent=5 // pred_check
        _
      $region42: #{tpu_custom_call.1} parent=5 // pred_check_branch
        %303 = sbr.rel (%p300) target = $region44
      $region43: #{tpu_custom_call.1} parent=5 // pred_region
        %s304 = ssub.s32 %s13, 1
        // Predicated region
        $region45: #{tpu_custom_call.1} parent=43 // pred_check
          %p305 = pneg %p46
        $region46: #{tpu_custom_call.1} parent=43 // pred_check_branch
          %307 = sbr.rel (%p305) target = $region48
        $region47: #{tpu_custom_call.1} parent=43 // pred_region
          %309 = dma.done [#allocation3], 16
        $region48: #{tpu_custom_call.1} parent=43 // pred_fallthru
          _
        %310 = sfence
        %p311 = pneg %p46
        %p312 = pneg %p43
        %p313 = scmp.lt.s32.totalorder %s22, 1
        %s314 = scalar_select %p313, %s22, 1
        %p315 = scmp.lt.s32.totalorder %s23, 1
        %s316 = scalar_select %p315, %s23, 1
        %s317 = smul.addr %s314, 2
        %s318 = sadd.s32 %s316, %s317
        %s319 = smul.addr %s318, 8
        %s320 = scalar_lea.vmem %s1, %s319
        %p321 = pneg %p74
        %p322 = pneg %p71
        %p323 = scmp.lt.s32.totalorder %s22, 1
        %s324 = scalar_select %p323, %s22, 1
        %p325 = scmp.lt.s32.totalorder %s23, 1
        %s326 = scalar_select %p325, %s23, 1
        %s327 = smul.addr %s324, 2
        %s328 = sadd.s32 %s326, %s327
        %s329 = smul.addr %s328, 8
        %s330 = scalar_lea.vmem %s2, %s329
        %p331 = pneg %p102
        %p332 = pneg %p99
        %p333 = scmp.lt.s32.totalorder %s22, 1
        %s334 = scalar_select %p333, %s22, 1
        %p335 = scmp.lt.s32.totalorder %s23, 1
        %s336 = scalar_select %p335, %s23, 1
        %s337 = smul.addr %s334, 2
        %s338 = sadd.s32 %s336, %s337
        %s339 = smul.addr %s338, 8
        %s340 = scalar_lea.vmem %s3, %s339
        %p341 = pneg %p130
        %p342 = pneg %p127
        %p343 = scmp.lt.s32.totalorder %s22, 1
        %s344 = scalar_select %p343, %s22, 1
        %p345 = scmp.lt.s32.totalorder %s23, 1
        %s346 = scalar_select %p345, %s23, 1
        %s347 = smul.addr %s344, 2
        %s348 = sadd.s32 %s346, %s347
        %s349 = smul.addr %s348, 8
        %s350 = scalar_lea.vmem %s4, %s349
        %p351 = pneg %p158
        %p352 = pneg %p155
        %p353 = scmp.lt.s32.totalorder %s22, 1
        %s354 = scalar_select %p353, %s22, 1
        %p355 = scmp.lt.s32.totalorder %s23, 1
        %s356 = scalar_select %p355, %s23, 1
        %s357 = smul.addr %s354, 2
        %s358 = sadd.s32 %s356, %s357
        %s359 = smul.addr %s358, 8
        %s360 = scalar_lea.vmem %s5, %s359
        %p361 = pneg %p186
        %p362 = pneg %p183
        %p363 = pneg %p214
        %p364 = pneg %p211
        %p365 = scmp.lt.s32.totalorder %s22, 1
        %s366 = scalar_select %p365, %s22, 1
        %p367 = scmp.lt.s32.totalorder %s23, 1
        %s368 = scalar_select %p367, %s23, 1
        %s369 = smul.addr %s366, 2
        %s370 = sadd.s32 %s368, %s369
        %s371 = smul.addr %s370, 8
        %s372 = scalar_lea.vmem %s6, %s371
        %p373 = scmp.lt.s32.totalorder %s22, 1
        %s374 = scalar_select %p373, %s22, 1
        %p375 = scmp.lt.s32.totalorder %s23, 1
        %s376 = scalar_select %p375, %s23, 1
        %s377 = smul.addr %s374, 2
        %s378 = sadd.s32 %s376, %s377
        %s379 = smul.addr %s378, 8
        %s380 = scalar_lea.vmem %s1, %s379
        %p381 = scmp.lt.s32.totalorder %s22, 1
        %s382 = scalar_select %p381, %s22, 1
        %p383 = scmp.lt.s32.totalorder %s23, 1
        %s384 = scalar_select %p383, %s23, 1
        %s385 = smul.addr %s382, 2
        %s386 = sadd.s32 %s384, %s385
        %s387 = smul.addr %s386, 8
        %s388 = scalar_lea.vmem %s2, %s387
        %p389 = scmp.lt.s32.totalorder %s22, 1
        %s390 = scalar_select %p389, %s22, 1
        %p391 = scmp.lt.s32.totalorder %s23, 1
        %s392 = scalar_select %p391, %s23, 1
        %s393 = smul.addr %s390, 2
        %s394 = sadd.s32 %s392, %s393
        %s395 = smul.addr %s394, 8
        %s396 = scalar_lea.vmem %s3, %s395
        %p397 = scmp.lt.s32.totalorder %s22, 1
        %s398 = scalar_select %p397, %s22, 1
        %p399 = scmp.lt.s32.totalorder %s23, 1
        %s400 = scalar_select %p399, %s23, 1
        %s401 = smul.addr %s398, 2
        %s402 = sadd.s32 %s400, %s401
        %s403 = smul.addr %s402, 8
        %s404 = scalar_lea.vmem %s4, %s403
        %p405 = scmp.lt.s32.totalorder %s22, 1
        %s406 = scalar_select %p405, %s22, 1
        %p407 = scmp.lt.s32.totalorder %s23, 1
        %s408 = scalar_select %p407, %s23, 1
        %s409 = smul.addr %s406, 2
        %s410 = sadd.s32 %s408, %s409
        %s411 = smul.addr %s410, 8
        %s412 = scalar_lea.vmem %s5, %s411
        %p413 = scmp.lt.s32.totalorder %s22, 1
        %s414 = scalar_select %p413, %s22, 1
        %p415 = scmp.lt.s32.totalorder %s23, 1
        %s416 = scalar_select %p415, %s23, 1
        %s417 = smul.addr %s414, 2
        %s418 = sadd.s32 %s416, %s417
        %s419 = smul.addr %s418, 8
        %s420 = scalar_lea.vmem %s6, %s419
        %s421 = sld [smem:[#allocation2]]
        %v422 = vld [vmem:[%s380] sm:$0xff]
        %v423 = vstv %s421
        %v424 = vmul.f32 %v423, %v422
        %s425 = sld [smem:[#allocation2 + $0x1]]
        %v426 = vld [vmem:[%s388] sm:$0xff]
        %v427 = vstv %s425
        %v428 = vmul.f32 %v427, %v426
        %v429 = vadd.f32 %v424, %v428
        %s430 = sld [smem:[#allocation2 + $0x2]]
        %v431 = vld [vmem:[%s396] sm:$0xff]
        %v432 = vstv %s430
        %v433 = vmul.f32 %v432, %v431
        %v434 = vadd.f32 %v429, %v433
        %s435 = sld [smem:[#allocation2 + $0x3]]
        %v436 = vld [vmem:[%s404] sm:$0xff]
        %v437 = vstv %s435
        %v438 = vmul.f32 %v437, %v436
        %v439 = vadd.f32 %v434, %v438
        %s440 = sld [smem:[#allocation2 + $0x4]]
        %v441 = vld [vmem:[%s412] sm:$0xff]
        %v442 = vstv %s440
        %v443 = vmul.f32 %v442, %v441
        %v444 = vadd.f32 %v439, %v443
        %445 = vst [vmem:[%s420] sm:$0xff] %v444
        %p446 = scmp.lt.s32.totalorder %s22, 1
        %s447 = scalar_select %p446, %s22, 1
        %p448 = scmp.lt.s32.totalorder %s23, 1
        %s449 = scalar_select %p448, %s23, 1
        %s450 = smul.addr %s447, 2
        %s451 = sadd.s32 %s449, %s450
        %s452 = smul.addr %s451, 8
        %s453 = scalar_lea.vmem %s6, %s452
        // Predicated region
        $region49: #{tpu_custom_call.1} parent=43 // pred_check
          %p454 = pneg %p211
        $region50: #{tpu_custom_call.1} parent=43 // pred_check_branch
          %456 = sbr.rel (%p454) target = $region52
        $region51: #{tpu_custom_call.1} parent=43 // pred_region
          _
        $region52: #{tpu_custom_call.1} parent=43 // pred_fallthru
          _
      $region44: #{tpu_custom_call.1} parent=5 // pred_fallthru
        _
      %p457 = scmp.le.s32.totalorder 2, %s13
      // Predicated region
      $region53: #{tpu_custom_call.1} parent=5 // pred_check
        %p458 = pneg %p457
      $region54: #{tpu_custom_call.1} parent=5 // pred_check_branch
        %460 = sbr.rel (%p458) target = $region56
      $region55: #{tpu_custom_call.1} parent=5 // pred_region
        %s461 = ssub.s32 %s13, 2
        // Predicated region
        $region57: #{tpu_custom_call.1} parent=55 // pred_check
          %p462 = pneg %p217
        $region58: #{tpu_custom_call.1} parent=55 // pred_check_branch
          %464 = sbr.rel (%p462) target = $region60
        $region59: #{tpu_custom_call.1} parent=55 // pred_region
          %p465 = scmp.lt.s32.totalorder %s24, 1
          %s466 = scalar_select %p465, %s24, 1
          %p467 = scmp.lt.s32.totalorder %s25, 1
          %s468 = scalar_select %p467, %s25, 1
          %s469 = smul.addr %s466, 2
          %s470 = sadd.s32 %s468, %s469
          %s471 = smul.addr %s470, 8
          %s472 = scalar_lea.vmem %s6, %s471
        $region60: #{tpu_custom_call.1} parent=55 // pred_fallthru
          _
      $region56: #{tpu_custom_call.1} parent=5 // pred_fallthru
        _
    $region6: #{tpu_custom_call.1} parent=1 // loop_footer
      %s17 = sadd.s32 1, %s13
    $region7: #{tpu_custom_call.1} parent=1 // loop_footer_branch
      %12 = sbr.rel target = $region3
    $region8: #{tpu_custom_call.1} parent=1 // loop_exit
      _
    %473 = vsyncpa [#allocation3], 1
    %s474 = scalar_lea.sflag [#allocation3], 1
    %475 = vsyncpa %s474, 1

</llo_original>
